<compile_context>
chip_gen: v7x
topology: tpu7x:2x2x1
jax: 0.10.0
libtpu: 0.0.40
codegen_flags: <defaults>
</compile_context>

<pallas_src>
import functools

import jax
import jax.numpy as jnp
from jax.experimental import pallas as pl
from jax.experimental.pallas import tpu as pltpu


def _layernorm_kernel(x_ref, g_ref, b_ref, o_ref, *, eps):
    # x_ref: (C, T) tile. Reduce over channels (sublane axis 0); lanes = H*W.
    x = x_ref[...].astype(jnp.float32)                       # (C, T)
    mean = jnp.mean(x, axis=0, keepdims=True)                # (1, T)
    xm = x - mean                                            # (C, T) centered
    var = jnp.mean(xm * xm, axis=0, keepdims=True)           # (1, T) unbiased=False
    # eps added to std (not var) -> matches torch: (x - mean) / (std + eps).
    # reciprocal only touches (1, T) columns, ~1/C of the elements.
    inv = pl.reciprocal(jnp.sqrt(var) + eps, approx=False)   # (1, T)
    g = g_ref[...].astype(jnp.float32)                       # (C, 1) broadcast
    b = b_ref[...].astype(jnp.float32)                       # (C, 1) broadcast
    # Inline broadcasts: no (C, T) scale/shift temporaries are materialized.
    o_ref[...] = ((xm * inv) * g + b).astype(o_ref.dtype)


def _vmem_budgets():
    """Return (tile_budget_bytes, vmem_limit_bytes) for this TPU generation."""
    try:
        vmem_cap = pltpu.get_tpu_info().vmem_capacity_bytes
    except Exception:
        vmem_cap = 64 << 20  # unknown -> be conservative (v7x-safe)
    if vmem_cap >= (96 << 20):
        # v5e / v6e: 128 MiB physical VMEM -> big streaming tiles.
        return 40 << 20, 64 << 20
    # v7x: 64 MiB per TensorCore -> keep scoped limit well under physical.
    return 24 << 20, 48 << 20


def _pick_lane_tile(hw, c, in_itemsize, *, vmem_budget, max_lanes=1 << 16,
                    force_split=False):
    # Per-lane VMEM bytes:
    #   4 * C * itemsize   : (in + out) x double-buffered I/O blocks
    #   3 * C * 4          : f32 upcast, centered x, output expression (live temps)
    per_lane = c * (4 * in_itemsize + 3 * 4)
    cap = max(128, vmem_budget // max(1, per_lane))
    cap = min(cap, max_lanes)
    if force_split and hw >= 256:
        # Guarantee >= 2 lane blocks so a megacore split has work for both TCs.
        cap = min(cap, max(128, ((hw // 2) // 128) * 128))
    if hw <= cap:
        return hw                           # block == full axis: always legal
    return max(128, (cap // 128) * 128)     # lane-aligned; edge block is masked


def layernorm_nchw(x, g, b, *, eps=1e-5):
    """x: (N, C, H, W); g, b: (1, C, 1, 1) (PyTorch parameter shapes)."""
    n, c, h, w = x.shape
    hw = h * w

    # Free reshapes only (contiguous dim merges) -- no transpose HBM passes.
    x3 = x.reshape(n, c, hw)
    g2 = g.reshape(c, 1)
    b2 = b.reshape(c, 1)

    tile_budget, vmem_limit = _vmem_budgets()
    t_hw = _pick_lane_tile(hw, c, x.dtype.itemsize,
                           vmem_budget=tile_budget,
                           force_split=(n == 1))
    grid = (n, pl.cdiv(hw, t_hw))

    kernel = functools.partial(_layernorm_kernel, eps=eps)

    out3 = pl.pallas_call(
        kernel,
        out_shape=jax.ShapeDtypeStruct((n, c, hw), x.dtype),
        grid_spec=pltpu.PrefetchScalarGridSpec(
            num_scalar_prefetch=0,
            grid=grid,
            in_specs=[
                # (C, t_hw) tile of sample i, lane-window j (batch dim squeezed)
                pl.BlockSpec((None, c, t_hw), lambda i, j: (i, 0, j)),
                pl.BlockSpec((c, 1), lambda i, j: (0, 0)),
                pl.BlockSpec((c, 1), lambda i, j: (0, 0)),
            ],
            out_specs=pl.BlockSpec((None, c, t_hw), lambda i, j: (i, 0, j)),
        ),
        compiler_params=pltpu.CompilerParams(
            dimension_semantics=("parallel", "parallel"),
            vmem_limit_bytes=vmem_limit,
        ),
    )(x3, g2, b2)

    return out3.reshape(n, c, h, w)


def _reference(x, g, b, eps=1e-5):
    xf = x.astype(jnp.float32)
    mean = jnp.mean(xf, axis=1, keepdims=True)
    var = jnp.mean((xf - mean) ** 2, axis=1, keepdims=True)
    std = jnp.sqrt(var)
    out = (xf - mean) / (std + eps) * g.astype(jnp.float32) + b.astype(jnp.float32)
    return out.astype(x.dtype)


def _check(x, g, b, *, eps=1e-5, atol=1e-5, rtol=1e-5):
    out = jax.block_until_ready(layernorm_nchw(x, g, b, eps=eps))
    ref = _reference(x, g, b, eps=eps)
    assert out.shape == x.shape
    assert jnp.allclose(out.astype(jnp.float32), ref.astype(jnp.float32),
                        atol=atol, rtol=rtol), "mismatch vs reference"


if __name__ == "__main__":
    key = jax.random.PRNGKey(0)
    k1, k2, k3, k4 = jax.random.split(key, 4)

    # Primary case (matches reported input_shapes): single full-HW block per sample.
    n, c, h, w = 2, 4, 16, 16
    x = jax.random.normal(k1, (n, c, h, w), dtype=jnp.float32)
    g = jnp.ones((1, c, 1, 1), dtype=jnp.float32)   # nn.Parameter(torch.ones)
    b = jnp.zeros((1, c, 1, 1), dtype=jnp.float32)  # nn.Parameter(torch.zeros)
    _check(x, g, b)

    # N == 1: HW split into 2 lane-aligned blocks (megacore path).
    x1 = jax.random.normal(k2, (1, c, 16, 16), dtype=jnp.float32)
    _check(x1, g, b)

    # Ragged HW (17*16 = 272): exercises the masked edge block.
    xe = jax.random.normal(k3, (1, 8, 17, 16), dtype=jnp.float32)
    ge = jax.random.normal(k3, (1, 8, 1, 1), dtype=jnp.float32)
    be = jax.random.normal(k4, (1, 8, 1, 1), dtype=jnp.float32)
    _check(xe, ge, be)

    # bf16 input path (f32 accumulation inside the kernel).
    xb = jax.random.normal(k4, (n, c, h, w), dtype=jnp.bfloat16)
    _check(xb, g, b, atol=2e-2, rtol=2e-2)

    print("KERNEL_OK")
</pallas_src>

<mosaic_0001>
module attributes {stable_mosaic.version = 11 : i64} {
  func.func @_layernorm_kernel(%arg0: i32, %arg1: i32, %arg2: memref<1x4x256xf32, #tpu.memory_space<vmem>>, %arg3: memref<4x1xf32, #tpu.memory_space<vmem>>, %arg4: memref<4x1xf32, #tpu.memory_space<vmem>>, %arg5: memref<1x4x256xf32, #tpu.memory_space<vmem>>) attributes {dimension_semantics = [#tpu.dimension_semantics<parallel>, #tpu.dimension_semantics<parallel>], iteration_bounds = array<i64: 2, 1>, scalar_prefetch = 0 : i64, scratch_operands = 0 : i64, tpu.core_type = #tpu.core_type<tc>, window_params = [{transform_indices = @transform_0, window_bounds = array<i64: 1, 4, 256>}, {pipeline_mode = #tpu.pipeline_mode<synchronous>, transform_indices = @transform_1, window_bounds = array<i64: 4, 1>}, {pipeline_mode = #tpu.pipeline_mode<synchronous>, transform_indices = @transform_2, window_bounds = array<i64: 4, 1>}, {transform_indices = @transform_3, window_bounds = array<i64: 1, 4, 256>}]} {
    %c0 = arith.constant 0 : index
    %c0_0 = arith.constant 0 : index
    %c0_1 = arith.constant 0 : index
    %0 = vector.load %arg2[%c0, %c0_0, %c0_1] : memref<1x4x256xf32, #tpu.memory_space<vmem>>, vector<1x4x256xf32>
    %1 = vector.shape_cast %0 : vector<1x4x256xf32> to vector<4x256xf32>
    %cst = arith.constant dense<0.000000e+00> : vector<256xf32>
    %2 = vector.multi_reduction <add>, %1, %cst [0] : vector<4x256xf32> to vector<256xf32>
    %3 = vector.shape_cast %2 : vector<256xf32> to vector<1x256xf32>
    %cst_2 = arith.constant 4.000000e+00 : f32
    %4 = vector.broadcast %cst_2 : f32 to vector<1x256xf32>
    %5 = arith.divf %3, %4 : vector<1x256xf32>
    %6 = vector.broadcast %5 : vector<1x256xf32> to vector<4x256xf32>
    %7 = arith.subf %1, %6 : vector<4x256xf32>
    %8 = arith.mulf %7, %7 : vector<4x256xf32>
    %cst_3 = arith.constant dense<0.000000e+00> : vector<256xf32>
    %9 = vector.multi_reduction <add>, %8, %cst_3 [0] : vector<4x256xf32> to vector<256xf32>
    %10 = vector.shape_cast %9 : vector<256xf32> to vector<1x256xf32>
    %cst_4 = arith.constant 4.000000e+00 : f32
    %11 = vector.broadcast %cst_4 : f32 to vector<1x256xf32>
    %12 = arith.divf %10, %11 : vector<1x256xf32>
    %13 = math.sqrt %12 : vector<1x256xf32>
    %cst_5 = arith.constant 9.99999974E-6 : f32
    %14 = vector.broadcast %cst_5 : f32 to vector<1x256xf32>
    %15 = arith.addf %13, %14 : vector<1x256xf32>
    %16 = tpu.reciprocal %15 : vector<1x256xf32> -> vector<1x256xf32>
    %c0_6 = arith.constant 0 : index
    %c0_7 = arith.constant 0 : index
    %17 = vector.load %arg3[%c0_6, %c0_7] : memref<4x1xf32, #tpu.memory_space<vmem>>, vector<4x1xf32>
    %c0_8 = arith.constant 0 : index
    %c0_9 = arith.constant 0 : index
    %18 = vector.load %arg4[%c0_8, %c0_9] : memref<4x1xf32, #tpu.memory_space<vmem>>, vector<4x1xf32>
    %19 = vector.broadcast %16 : vector<1x256xf32> to vector<4x256xf32>
    %20 = arith.mulf %7, %19 : vector<4x256xf32>
    %21 = vector.broadcast %17 : vector<4x1xf32> to vector<4x256xf32>
    %22 = arith.mulf %20, %21 : vector<4x256xf32>
    %23 = vector.broadcast %18 : vector<4x1xf32> to vector<4x256xf32>
    %24 = arith.addf %22, %23 : vector<4x256xf32>
    %c0_10 = arith.constant 0 : index
    %c0_11 = arith.constant 0 : index
    %c0_12 = arith.constant 0 : index
    %25 = vector.load %arg5[%c0_10, %c0_11, %c0_12] : memref<1x4x256xf32, #tpu.memory_space<vmem>>, vector<1x4x256xf32>
    %26 = vector.shape_cast %25 : vector<1x4x256xf32> to vector<4x256xf32>
    %27 = vector.shape_cast %24 : vector<4x256xf32> to vector<1x4x256xf32>
    tpu.vector_store %arg5[%c0_10, %c0_11, %c0_12], %27 {strides = array<i32>} : memref<1x4x256xf32, #tpu.memory_space<vmem>>, vector<1x4x256xf32>,
    return
  }
  func.func @transform_0(%arg0: i32, %arg1: i32) -> (i32, i32, i32) {
    %c0_i32 = arith.constant 0 : i32
    %c0_i32_0 = arith.constant 0 : i32
    return %arg0, %c0_i32, %arg1 : i32, i32, i32
  }
  func.func @transform_1(%arg0: i32, %arg1: i32) -> (i32, i32) {
    %c0_i32 = arith.constant 0 : i32
    %c0_i32_0 = arith.constant 0 : i32
    %c0_i32_1 = arith.constant 0 : i32
    return %c0_i32, %c0_i32_0 : i32, i32
  }
  func.func @transform_2(%arg0: i32, %arg1: i32) -> (i32, i32) {
    %c0_i32 = arith.constant 0 : i32
    %c0_i32_0 = arith.constant 0 : i32
    %c0_i32_1 = arith.constant 0 : i32
    return %c0_i32, %c0_i32_0 : i32, i32
  }
  func.func @transform_3(%arg0: i32, %arg1: i32) -> (i32, i32, i32) {
    %c0_i32 = arith.constant 0 : i32
    %c0_i32_0 = arith.constant 0 : i32
    return %arg0, %c0_i32, %arg1 : i32, i32, i32
  }
}

</mosaic_0001>

<llo_original>
// kernel: tpu_custom_call.1
$region0: #{tpu_custom_call.1}
  #allocation0 [shape = 'u32[]', space=smem, size = 0x4, offset = 0x4, fixed_abs, tag = 'smem constant byte address 0x4 - core index']
  #allocation1 [shape = 'u32[144,128]{1,0:T(1,128)}', space=vmem, size = 0x12000, scoped, tag = 'internal scratch']
  %s0 = inlined_call_operand.hbm [shape: f32[2,4,256], index: 0, kind: input, shape index: {}]
  %s1 = inlined_call_operand.vmem [shape: f32[4,1], index: 1, kind: input, shape index: {}]
  %s2 = inlined_call_operand.vmem [shape: f32[4,1], index: 2, kind: input, shape index: {}]
  %s3 = inlined_call_operand.hbm [shape: f32[2,4,256], index: 3, kind: output, shape index: {}]
  %s4 = sld [smem:[#allocation0]]
  $region49: #{tpu_custom_call.1} parent=0
    _
  %s6 = ssub.s32 1, %s4
  %s7 = scalar_select 0, %s6, %s4
  $region1: #{tpu_custom_call.1} parent=0
    #allocation2 [shape = 'u8[8192]{0}', space=vmem, size = 0x2000, scoped, tag = 'input window, operand 0']
    #allocation3 [shape = 's32[2]{0}', space=sflag, size = 0x8, scoped, tag = 'scoped memory for tpu_custom_call.1']
    #allocation4 [shape = 's32[2]{0}', space=sflag, size = 0x8, scoped, tag = 'scoped memory for tpu_custom_call.1']
    #allocation5 [shape = 'u8[8192]{0}', space=vmem, size = 0x2000, scoped, tag = 'output window, operand 0']
    %8 = vsyncpa [#allocation3], 0
    %s9 = scalar_lea.sflag [#allocation3], 1
    %10 = vsyncpa %s9, 0
    %11 = vsyncpa [#allocation4], 0
    %s12 = scalar_lea.sflag [#allocation4], 1
    %13 = vsyncpa %s12, 0
    loop: start=0, step=1, limit=4
    $region2: #{tpu_custom_call.1} parent=1 // loop_pre_header
      _
    $region3: #{tpu_custom_call.1} parent=1 // loop_header
      %s15 = sphi 0, %s19
      %p16 = scmp.ge.s32.totalorder %s15, 4
      %s22 = sphi 0, %s34
      %s23 = sphi 0, %s30
      %s24 = sphi 0, %s22
      %s25 = sphi 0, %s23
      %s26 = sphi 0, %s24
      %s27 = sphi 0, %s25
      %s39 = sphi 0, %s41
      %s42 = sphi 0, %s39
      %s43 = sphi 0, %s42
      %s59 = sphi 0, %s43
      %s63 = sphi 0, %s63
      %s65 = sphi 0, %s63
      %s66 = sphi 0, %s65
      %s80 = sphi 0, %s66
      %s84 = sphi 0, %s84
      %s86 = sphi 0, %s84
      %s87 = sphi 0, %s86
      %s101 = sphi 0, %s87
      %s109 = sphi 0, %s111
      %s112 = sphi 0, %s109
      %s113 = sphi 0, %s112
      %s129 = sphi 0, %s113
    $region4: #{tpu_custom_call.1} parent=1 // loop_header_branch
      %18 = sbr.rel (%p16) target = $region8
    $region5: #{tpu_custom_call.1} parent=1 // loop_body
      %s20 = ssub.s32 %s15, 1
      %s21 = ssub.s32 %s15, 2
      %s28 = sadd.s32 1, %s23
      %p29 = scmp.ge.s32.totalorder %s28, 1
      %s30 = scalar_select %p29, 0, %s28
      %s31 = sadd.s32 1, %s22
      %s32 = scalar_select %p29, %s31, %s22
      %p33 = scmp.ge.s32.totalorder %s32, 2
      %s34 = scalar_select %p33, 0, %s32
      %s35 = ssub.s32 %s22, %s34
      %s36 = ssub.s32 %s23, %s30
      %s37 = sor.u32 %s35, %s36
      %p38 = scmp.eq.s32.totalorder %s37, 0
      %s40 = sadd.s32 %s39, 1
      %s41 = scalar_select %p38, %s39, %s40
      %p44 = pneg %p38
      %p45 = scmp.eq.s32.totalorder %s15, 1
      %p46 = por %p44, %p45
      %p47 = scmp.ne.s32.totalorder %s39, %s42
      %p48 = scmp.eq.s32.totalorder %s15, 0
      %p49 = por %p47, %p48
      %p50 = scmp.ne.s32.totalorder %s39, %s42
      %p51 = scmp.eq.s32.totalorder %s20, 1
      %p52 = por %p50, %p51
      %p53 = scmp.ne.s32.totalorder %s42, %s43
      %p54 = scmp.eq.s32.totalorder %s20, 0
      %p55 = por %p53, %p54
      %p56 = scmp.ne.s32.totalorder %s42, %s43
      %p57 = scmp.eq.s32.totalorder %s21, 1
      %p58 = por %p56, %p57
      %p60 = scmp.ne.s32.totalorder %s43, %s59
      %p61 = scmp.eq.s32.totalorder %s21, 0
      %p62 = por %p60, %p61
      %s64 = sadd.s32 %s63, 1
      %p67 = scmp.eq.s32.totalorder %s15, 1
      %p68 = scmp.ne.s32.totalorder %s63, %s65
      %p69 = scmp.eq.s32.totalorder %s15, 0
      %p70 = por %p68, %p69
      %p71 = scmp.ne.s32.totalorder %s63, %s65
      %p72 = scmp.eq.s32.totalorder %s20, 1
      %p73 = por %p71, %p72
      %p74 = scmp.ne.s32.totalorder %s65, %s66
      %p75 = scmp.eq.s32.totalorder %s20, 0
      %p76 = por %p74, %p75
      %p77 = scmp.ne.s32.totalorder %s65, %s66
      %p78 = scmp.eq.s32.totalorder %s21, 1
      %p79 = por %p77, %p78
      %p81 = scmp.ne.s32.totalorder %s66, %s80
      %p82 = scmp.eq.s32.totalorder %s21, 0
      %p83 = por %p81, %p82
      %s85 = sadd.s32 %s84, 1
      %p88 = scmp.eq.s32.totalorder %s15, 1
      %p89 = scmp.ne.s32.totalorder %s84, %s86
      %p90 = scmp.eq.s32.totalorder %s15, 0
      %p91 = por %p89, %p90
      %p92 = scmp.ne.s32.totalorder %s84, %s86
      %p93 = scmp.eq.s32.totalorder %s20, 1
      %p94 = por %p92, %p93
      %p95 = scmp.ne.s32.totalorder %s86, %s87
      %p96 = scmp.eq.s32.totalorder %s20, 0
      %p97 = por %p95, %p96
      %p98 = scmp.ne.s32.totalorder %s86, %s87
      %p99 = scmp.eq.s32.totalorder %s21, 1
      %p100 = por %p98, %p99
      %p102 = scmp.ne.s32.totalorder %s87, %s101
      %p103 = scmp.eq.s32.totalorder %s21, 0
      %p104 = por %p102, %p103
      %s105 = ssub.s32 %s22, %s34
      %s106 = ssub.s32 %s23, %s30
      %s107 = sor.u32 %s105, %s106
      %p108 = scmp.eq.s32.totalorder %s107, 0
      %s110 = sadd.s32 %s109, 1
      %s111 = scalar_select %p108, %s109, %s110
      %p114 = pneg %p108
      %p115 = scmp.eq.s32.totalorder %s15, 1
      %p116 = por %p114, %p115
      %p117 = scmp.ne.s32.totalorder %s109, %s112
      %p118 = scmp.eq.s32.totalorder %s15, 0
      %p119 = por %p117, %p118
      %p120 = scmp.ne.s32.totalorder %s109, %s112
      %p121 = scmp.eq.s32.totalorder %s20, 1
      %p122 = por %p120, %p121
      %p123 = scmp.ne.s32.totalorder %s112, %s113
      %p124 = scmp.eq.s32.totalorder %s20, 0
      %p125 = por %p123, %p124
      %p126 = scmp.ne.s32.totalorder %s112, %s113
      %p127 = scmp.eq.s32.totalorder %s21, 1
      %p128 = por %p126, %p127
      %p130 = scmp.ne.s32.totalorder %s113, %s129
      %p131 = scmp.eq.s32.totalorder %s21, 0
      %p132 = por %p130, %p131
      %p133 = scmp.le.s32.totalorder 1, %s15
      %p134 = scmp.lt.s32.totalorder %s15, 3
      %p135 = pnand %p133, %p134
      %p136 = pneg %p135
      // Predicated region
      $region9: #{tpu_custom_call.1} parent=5 // pred_check
        _
      $region10: #{tpu_custom_call.1} parent=5 // pred_check_branch
        %138 = sbr.rel (%p135) target = $region12
      $region11: #{tpu_custom_call.1} parent=5 // pred_region
        %s139 = ssub.s32 %s15, 1
        // Predicated region
        $region13: #{tpu_custom_call.1} parent=11 // pred_check
          %p140 = pneg %p76
        $region14: #{tpu_custom_call.1} parent=11 // pred_check_branch
          %142 = sbr.rel (%p140) target = $region16
        $region15: #{tpu_custom_call.1} parent=11 // pred_region
          _
        $region16: #{tpu_custom_call.1} parent=11 // pred_fallthru
          _
        // Predicated region
        $region17: #{tpu_custom_call.1} parent=11 // pred_check
          %p143 = pneg %p97
        $region18: #{tpu_custom_call.1} parent=11 // pred_check_branch
          %145 = sbr.rel (%p143) target = $region20
        $region19: #{tpu_custom_call.1} parent=11 // pred_region
          _
        $region20: #{tpu_custom_call.1} parent=11 // pred_fallthru
          _
      $region12: #{tpu_custom_call.1} parent=5 // pred_fallthru
        _
      %p146 = scmp.lt.s32.totalorder %s15, 2
      // Predicated region
      $region21: #{tpu_custom_call.1} parent=5 // pred_check
        %p147 = pneg %p146
      $region22: #{tpu_custom_call.1} parent=5 // pred_check_branch
        %149 = sbr.rel (%p147) target = $region24
      $region23: #{tpu_custom_call.1} parent=5 // pred_region
        // Predicated region
        $region25: #{tpu_custom_call.1} parent=23 // pred_check
          %p150 = pneg %p49
        $region26: #{tpu_custom_call.1} parent=23 // pred_check_branch
          %152 = sbr.rel (%p150) target = $region28
        $region27: #{tpu_custom_call.1} parent=23 // pred_region
          %s153 = sand.u32 %s39, 1
          %s154 = scalar_lea.sflag [#allocation3], %s153
          %s155 = sand.u32 %s39, 1
          %s156 = smul.addr %s155, 8
          %s157 = scalar_lea.vmem [#allocation2], %s156
          %s158 = smul.u32 2, %s23
          %s160 = ssub.s32 128, 128
          %161 = vsyncadd %s154, %s160
          %s162 = smul.addr %s22, 2
          %s163 = sadd.s32 %s158, %s162
          %s164 = smul.addr %s163, 64
          %s165 = scalar_lea.hbm %s0, %s164
          %s167 = sshll.u32 %s157, 4
          %s168 = int_to_ptr.vmem [resolvable:$true] %s167
          %170 = dma.hbm_to_vmem [thread:$0]  %s165, 128, %s168, %s154
        $region28: #{tpu_custom_call.1} parent=23 // pred_fallthru
          _
      $region24: #{tpu_custom_call.1} parent=5 // pred_fallthru
        _
      %p171 = scmp.le.s32.totalorder 1, %s15
      %p172 = scmp.lt.s32.totalorder %s15, 3
      %p173 = pnand %p171, %p172
      %p174 = pneg %p173
      // Predicated region
      $region29: #{tpu_custom_call.1} parent=5 // pred_check
        _
      $region30: #{tpu_custom_call.1} parent=5 // pred_check_branch
        %176 = sbr.rel (%p173) target = $region32
      $region31: #{tpu_custom_call.1} parent=5 // pred_region
        %s177 = ssub.s32 %s15, 1
        %s178 = sand.u32 %s42, 1
        %s179 = scalar_lea.sflag [#allocation3], %s178
        %s180 = sand.u32 %s42, 1
        %s181 = smul.addr %s180, 8
        %s182 = scalar_lea.vmem [#allocation2], %s181
        // Predicated region
        $region33: #{tpu_custom_call.1} parent=31 // pred_check
          %p183 = pneg %p55
        $region34: #{tpu_custom_call.1} parent=31 // pred_check_branch
          %185 = sbr.rel (%p183) target = $region36
        $region35: #{tpu_custom_call.1} parent=31 // pred_region
          %186 = dma.done %s179, 128
        $region36: #{tpu_custom_call.1} parent=31 // pred_fallthru
          _
        %s187 = sand.u32 %s42, 1
        %s188 = scalar_lea.sflag [#allocation3], %s187
        %s189 = sand.u32 %s42, 1
        %s190 = smul.addr %s189, 8
        %s191 = scalar_lea.vmem [#allocation2], %s190
        %p192 = pneg %p55
        %p193 = pneg %p52
        %p194 = pneg %p76
        %p195 = pneg %p73
        %p196 = pneg %p97
        %p197 = pneg %p94
        %p198 = pneg %p125
        %p199 = pneg %p122
        %s200 = sand.u32 %s112, 1
        %s201 = scalar_lea.sflag [#allocation4], %s200
        %s202 = sand.u32 %s112, 1
        %s203 = smul.addr %s202, 8
        %s204 = scalar_lea.vmem [#allocation5], %s203
        %s205 = smul.u32 2, %s25
        %s206 = smul.u32 2, %s25
        %v207 = vld [vmem:[%s182] sm:$0xff]
        %v209 = vcombine.high %v207, %v207
        %vm211 = vcmask 1043456
        %v212 = vsel %vm211, %v207, 0.0
        %v213 = vrot.slane %v212, 4
        %v214 = vadd.f32 %v212, %v213
        %v215 = vrot.slane %v214, 2
        %v216 = vadd.f32 %v214, %v215
        %v217 = vrot.slane %v216, 1
        %v218 = vadd.f32 %v216, %v217
        %v219 = vsel %vm211, %v209, 0.0
        %v220 = vrot.slane %v219, 4
        %v221 = vadd.f32 %v219, %v220
        %v222 = vrot.slane %v221, 2
        %v223 = vadd.f32 %v221, %v222
        %v224 = vrot.slane %v223, 1
        %v225 = vadd.f32 %v223, %v224
        %v226 = vrcp.pop 4.0
        %v227 = vmul.f32 %v218, %v226
        %v228 = vmul.f32 %v225, %v226
        %v231 = vcombine.low %v227, %v228
        %v233 = vsub.f32 %v207, %v231
        %v234 = vmul.f32 %v233, %v233
        %v236 = vcombine.high %v234, %v234
        %v238 = vsel %vm211, %v234, 0.0
        %v239 = vrot.slane %v238, 4
        %v240 = vadd.f32 %v238, %v239
        %v241 = vrot.slane %v240, 2
        %v242 = vadd.f32 %v240, %v241
        %v243 = vrot.slane %v242, 1
        %v244 = vadd.f32 %v242, %v243
        %v245 = vsel %vm211, %v236, 0.0
        %v246 = vrot.slane %v245, 4
        %v247 = vadd.f32 %v245, %v246
        %v248 = vrot.slane %v247, 2
        %v249 = vadd.f32 %v247, %v248
        %v250 = vrot.slane %v249, 1
        %v251 = vadd.f32 %v249, %v250
        %v252 = vmul.f32 %v244, %v226
        %v253 = vmul.f32 %v251, %v226
        %v254 = vrsqrt.pop %v252
        %v255 = vmul.f32 %v252, %v254
        %vm256 = vcmp.eq.f32.partialorder %v252, inf
        %v257 = vsel %vm256, %v252, %v255
        %vm258 = vcmp.eq.f32.partialorder %v252, 0.0
        %v259 = vand.u32 %v252, 2147483648
        %v260 = vsel %vm258, %v259, %v257
        %v261 = vrsqrt.pop %v253
        %v262 = vmul.f32 %v253, %v261
        %vm263 = vcmp.eq.f32.partialorder %v253, inf
        %v264 = vsel %vm263, %v253, %v262
        %vm265 = vcmp.eq.f32.partialorder %v253, 0.0
        %v266 = vand.u32 %v253, 2147483648
        %v267 = vsel %vm265, %v266, %v264
        %v268 = vadd.f32 %v260, 1e-05
        %v269 = vadd.f32 %v267, 1e-05
        %v270 = vrcp.pop %v268
        %v271 = vrcp.pop %v269
        %v272 = vld [vmem:[%s1] sm:$0xf]
        %v273 = vld [vmem:[%s2] sm:$0xf]
        %v276 = vcombine.low %v270, %v271
        %v278 = vmul.f32 %v233, %v276
        %280 = vset.pattern.permute.xlu0 0
        %281 = vperm.xlu0 %280, %v272
        %v282 = vpop.permute.xlu0 %281
        %v284 = vunpack.c.l.s4 839922192
        %v285 = vunpack.c.0.s8 %v284
        %v286 = vlaneseq
        %v287 = vshrl.u32 %v286, 7
        %v288 = vsub.s32 %v285, %v287
        %v289 = vrot.slane %v282, %v288
        %v291 = vmul.f32 %v278, %v289
        %293 = vset.pattern.permute.xlu0 0
        %294 = vperm.xlu0 %293, %v273
        %v295 = vpop.permute.xlu0 %294
        %v297 = vunpack.c.l.s4 839922192
        %v298 = vunpack.c.0.s8 %v297
        %v299 = vlaneseq
        %v300 = vshrl.u32 %v299, 7
        %v301 = vsub.s32 %v298, %v300
        %v302 = vrot.slane %v295, %v301
        %v304 = vadd.f32 %v291, %v302
        %305 = vst [vmem:[%s204] sm:$0xff] %v304
        %s306 = sand.u32 %s112, 1
        %s307 = scalar_lea.sflag [#allocation4], %s306
        %s308 = sand.u32 %s112, 1
        %s309 = smul.addr %s308, 8
        %s310 = scalar_lea.vmem [#allocation5], %s309
        // Predicated region
        $region37: #{tpu_custom_call.1} parent=31 // pred_check
          %p311 = pneg %p122
        $region38: #{tpu_custom_call.1} parent=31 // pred_check_branch
          %313 = sbr.rel (%p311) target = $region40
        $region39: #{tpu_custom_call.1} parent=31 // pred_region
          %s314 = smul.u32 2, %s25
          %s316 = ssub.s32 128, 128
          %317 = vsyncadd %s307, %s316
          %s318 = smul.addr %s24, 2
          %s319 = sadd.s32 %s314, %s318
          %s320 = smul.addr %s319, 64
          %s321 = scalar_lea.hbm %s3, %s320
          %s323 = sshll.u32 %s310, 4
          %s324 = int_to_ptr.vmem [resolvable:$true] %s323
          %326 = dma.vmem_to_hbm [thread:$0]  %s324, 128, %s321, %s307
        $region40: #{tpu_custom_call.1} parent=31 // pred_fallthru
          _
      $region32: #{tpu_custom_call.1} parent=5 // pred_fallthru
        _
      %p327 = scmp.le.s32.totalorder 2, %s15
      // Predicated region
      $region41: #{tpu_custom_call.1} parent=5 // pred_check
        %p328 = pneg %p327
      $region42: #{tpu_custom_call.1} parent=5 // pred_check_branch
        %330 = sbr.rel (%p328) target = $region44
      $region43: #{tpu_custom_call.1} parent=5 // pred_region
        %s331 = ssub.s32 %s15, 2
        // Predicated region
        $region45: #{tpu_custom_call.1} parent=43 // pred_check
          %p332 = pneg %p128
        $region46: #{tpu_custom_call.1} parent=43 // pred_check_branch
          %334 = sbr.rel (%p332) target = $region48
        $region47: #{tpu_custom_call.1} parent=43 // pred_region
          %s335 = sand.u32 %s113, 1
          %s336 = scalar_lea.sflag [#allocation4], %s335
          %s337 = sand.u32 %s113, 1
          %s338 = smul.addr %s337, 8
          %s339 = scalar_lea.vmem [#allocation5], %s338
          %340 = dma.done %s336, 128
        $region48: #{tpu_custom_call.1} parent=43 // pred_fallthru
          _
      $region44: #{tpu_custom_call.1} parent=5 // pred_fallthru
        _
    $region6: #{tpu_custom_call.1} parent=1 // loop_footer
      %s19 = sadd.s32 1, %s15
    $region7: #{tpu_custom_call.1} parent=1 // loop_footer_branch
      %14 = sbr.rel target = $region3
    $region8: #{tpu_custom_call.1} parent=1 // loop_exit
      _
    %341 = vsyncpa [#allocation3], 1
    %s342 = scalar_lea.sflag [#allocation3], 1
    %343 = vsyncpa %s342, 1
    %344 = vsyncpa [#allocation4], 1
    %s345 = scalar_lea.sflag [#allocation4], 1
    %346 = vsyncpa %s345, 1

</llo_original>
